<compile_context>
chip_gen: v5e
topology: v5e:2x2
jax: 0.10.0
libtpu: 0.0.40
codegen_flags: <defaults>
</compile_context>

<pallas_src>
import functools

import jax
import jax.numpy as jnp
from jax import lax
from jax.experimental import pallas as pl
from jax.experimental.pallas import tpu as pltpu


def _resblock_kernel(w1_ref, w2_ref, x_ref, o_ref, im2col_ref, *, H, W):
    """One batch element per grid step.

    w1_ref    : (Cout, 9*Cin) f32, VMEM   3x3 conv weight, column = (ky*3+kx)*Cin + ci
    w2_ref    : (Cout, Cout)  f32, VMEM   1x1 conv weight, transposed (co, ci)
    x_ref     : (1, Cin, HW)  VMEM        channels on sublanes, spatial on lanes
    o_ref     : (1, Cout, HW) VMEM        output tile (lane-dense)
    im2col_ref: (9*Cin, HW)   f32, VMEM   scratch holding the 9 masked taps
    """
    HW = H * W
    Cin = x_ref.shape[1]

    x2d = x_ref[0].astype(jnp.float32)                    # (Cin, HW)

    # In-kernel flattened-pixel coordinates (no extra HBM input).
    pos = lax.broadcasted_iota(jnp.int32, (1, HW), 1)     # flattened index p
    if (W & (W - 1)) == 0:
        col = pos & (W - 1)                               # p % W, W power of two
    else:
        col = pos % W

    # Border predicates, built ONCE and combined per tap.
    row_masks = {-1: pos >= W,            # tap dy=-1 needs h >= 1
                 0: None,
                 1: pos < (H - 1) * W}    # tap dy=+1 needs h <= H-2
    col_masks = {-1: col >= 1,            # tap dx=-1 needs w >= 1
                 0: None,
                 1: col <= W - 2}         # tap dx=+1 needs w <= W-2

    # 3x3 'SAME' conv, step 1: build the im2col scratch.
    # Tap (dy, dx) needs x[h+dy, w+dx] == x_flat[p + dy*W + dx] (zero outside
    # the image).  A circular roll (XLU slot) supplies all in-bounds values;
    # every wrapped-around position is out of bounds and masked to zero.
    # roll -> mask -> store is fused per tap to keep vreg pressure low.
    taps = [(ky - 1, kx - 1) for ky in range(3) for kx in range(3)]
    for t_idx, (dy, dx) in enumerate(taps):
        s = dy * W + dx
        t = x2d if s == 0 else pltpu.roll(x2d, shift=(-s) % HW, axis=1)
        m_r, m_c = row_masks[dy], col_masks[dx]
        if m_r is not None and m_c is not None:
            valid = jnp.logical_and(m_r, m_c)
        else:
            valid = m_r if m_r is not None else m_c
        if valid is not None:
            t = jnp.where(valid, t, 0.0)
        im2col_ref[pl.ds(t_idx * Cin, Cin), :] = t

    # Step 2: channel mixing on the MXU — one stacked contraction.
    h = jnp.dot(w1_ref[...], im2col_ref[...],
                preferred_element_type=jnp.float32)        # (Cout, HW)
    h = jnp.maximum(h, 0.0)                                # ReLU (VPU)

    # 1x1 conv on the MXU + residual add in f32; single lane-dense store.
    y = jnp.dot(w2_ref[...], h, preferred_element_type=jnp.float32)
    o_ref[0] = (x2d + y).astype(o_ref.dtype)


def residual_layer(x_nchw, w1_hwio, w2):
    """x_nchw: (B, Cin, H, W); w1_hwio: (3,3,Cin,Cout); w2: (Cin,Cout)."""
    B, Cin, H, W = x_nchw.shape
    Cout = w2.shape[1]
    assert w1_hwio.shape == (3, 3, Cin, Cout)
    assert Cin == Cout, "residual add requires in_channels == out_channels"
    HW = H * W

    # Free reshape only -- no transpose, no HBM padding pass over activations.
    x3 = x_nchw.reshape(B, Cin, HW)
    # One-time tiny host-side weight repacks:
    #   w1_2d[co, (ky*3+kx)*Cin + ci] = w1_hwio[ky, kx, ci, co]
    w1_2d = jnp.transpose(w1_hwio.astype(jnp.float32).reshape(9 * Cin, Cout))
    w2_t = jnp.transpose(w2.astype(jnp.float32))           # (Cout, Cin)

    kernel = functools.partial(_resblock_kernel, H=H, W=W)

    out3 = pl.pallas_call(
        kernel,
        out_shape=jax.ShapeDtypeStruct((B, Cout, HW), x_nchw.dtype),
        grid_spec=pltpu.PrefetchScalarGridSpec(
            num_scalar_prefetch=0,
            grid=(B,),
            in_specs=[
                pl.BlockSpec((Cout, 9 * Cin), lambda b: (0, 0)),   # w1 (resident)
                pl.BlockSpec((Cout, Cout), lambda b: (0, 0)),      # w2 (resident)
                pl.BlockSpec((1, Cin, HW), lambda b: (b, 0, 0)),   # x
            ],
            out_specs=pl.BlockSpec((1, Cout, HW), lambda b: (b, 0, 0)),
            scratch_shapes=[pltpu.VMEM((9 * Cin, HW), jnp.float32)],
        ),
        compiler_params=pltpu.CompilerParams(
            dimension_semantics=("parallel",),
        ),
    )(w1_2d, w2_t, x3)

    return out3.reshape(B, Cout, H, W)


def _reference(x_nchw, w1_hwio, w2):
    """Pure-JAX reference (lax convs, NHWC)."""
    x = jnp.transpose(x_nchw, (0, 2, 3, 1))
    h = lax.conv_general_dilated(
        x, w1_hwio, window_strides=(1, 1), padding="SAME",
        dimension_numbers=("NHWC", "HWIO", "NHWC"),
    )
    h = jnp.maximum(h, 0.0)
    y = jnp.einsum("bhwc,cd->bhwd", h, w2)
    out = x + y
    return jnp.transpose(out, (0, 3, 1, 2))


if __name__ == "__main__":
    B, C, H, W = 2, 4, 16, 16  # in_channels == out_channels == 4

    key = jax.random.PRNGKey(0)
    kx, k1, k2 = jax.random.split(key, 3)

    x = jax.random.normal(kx, (B, C, H, W), dtype=jnp.float32)
    # Deterministic weight init (kaiming-like scale); HWIO for conv3x3.
    w1 = jax.random.normal(k1, (3, 3, C, C), dtype=jnp.float32) * (2.0 / (9 * C)) ** 0.5
    w2 = jax.random.normal(k2, (C, C), dtype=jnp.float32) * (2.0 / C) ** 0.5

    out = residual_layer(x, w1, w2)
    out = jax.block_until_ready(out)

    ref = _reference(x, w1, w2)
    assert out.shape == (B, C, H, W)
    # Tolerance slightly looser than pure-VPU f32: the conv is now an MXU
    # contraction (f32 multi-pass); semantic bugs would show O(0.1-1) errors.
    assert jnp.allclose(out, ref, atol=1e-3, rtol=1e-3), "mismatch vs reference"

    print("KERNEL_OK")
</pallas_src>

<mosaic_0001>
module attributes {stable_mosaic.version = 11 : i64} {
  func.func @_resblock_kernel(%arg0: i32, %arg1: memref<4x36xf32, #tpu.memory_space<vmem>>, %arg2: memref<4x4xf32, #tpu.memory_space<vmem>>, %arg3: memref<1x4x256xf32, #tpu.memory_space<vmem>>, %arg4: memref<1x4x256xf32, #tpu.memory_space<vmem>>, %arg5: memref<36x256xf32, #tpu.memory_space<vmem>>) attributes {dimension_semantics = [#tpu.dimension_semantics<parallel>], iteration_bounds = array<i64: 2>, scalar_prefetch = 0 : i64, scratch_operands = 1 : i64, tpu.core_type = #tpu.core_type<tc>, window_params = [{pipeline_mode = #tpu.pipeline_mode<synchronous>, transform_indices = @transform_0, window_bounds = array<i64: 4, 36>}, {pipeline_mode = #tpu.pipeline_mode<synchronous>, transform_indices = @transform_1, window_bounds = array<i64: 4, 4>}, {transform_indices = @transform_2, window_bounds = array<i64: 1, 4, 256>}, {transform_indices = @transform_3, window_bounds = array<i64: 1, 4, 256>}]} {
    %c0 = arith.constant 0 : index
    %c0_0 = arith.constant 0 : index
    %c0_1 = arith.constant 0 : index
    %0 = vector.load %arg3[%c0, %c0_0, %c0_1] : memref<1x4x256xf32, #tpu.memory_space<vmem>>, vector<1x4x256xf32>
    %1 = vector.shape_cast %0 : vector<1x4x256xf32> to vector<4x256xf32>
    %2 = tpu.iota {dimensions = array<i32: 1>} : vector<1x256xi32>
    %c15_i32 = arith.constant 15 : i32
    %3 = vector.broadcast %c15_i32 : i32 to vector<1x256xi32>
    %4 = arith.andi %2, %3 : vector<1x256xi32>
    %c16_i32 = arith.constant 16 : i32
    %5 = vector.broadcast %c16_i32 : i32 to vector<1x256xi32>
    %6 = arith.cmpi sge, %2, %5 : vector<1x256xi32>
    %c240_i32 = arith.constant 240 : i32
    %7 = vector.broadcast %c240_i32 : i32 to vector<1x256xi32>
    %8 = arith.cmpi slt, %2, %7 : vector<1x256xi32>
    %c1_i32 = arith.constant 1 : i32
    %9 = vector.broadcast %c1_i32 : i32 to vector<1x256xi32>
    %10 = arith.cmpi sge, %4, %9 : vector<1x256xi32>
    %c14_i32 = arith.constant 14 : i32
    %11 = vector.broadcast %c14_i32 : i32 to vector<1x256xi32>
    %12 = arith.cmpi sle, %4, %11 : vector<1x256xi32>
    %c17_i32 = arith.constant 17 : i32
    %13 = tpu.dynamic_rotate %1 by %c17_i32 dim 1 : vector<4x256xf32>, i32 -> vector<4x256xf32>
    %14 = arith.andi %6, %10 : vector<1x256xi1>
    %cst = arith.constant 0.000000e+00 : f32
    %15 = vector.shape_cast %14 : vector<1x256xi1> to vector<1x256xi1>
    %16 = vector.broadcast %15 : vector<1x256xi1> to vector<4x256xi1>
    %17 = vector.broadcast %cst : f32 to vector<4x256xf32>
    %18 = arith.select %16, %13, %17 : vector<4x256xi1>, vector<4x256xf32>
    %c0_2 = arith.constant 0 : index
    %c0_3 = arith.constant 0 : index
    %19 = vector.load %arg5[%c0_2, %c0_3] : memref<36x256xf32, #tpu.memory_space<vmem>>, vector<4x256xf32>
    tpu.vector_store %arg5[%c0_2, %c0_3], %18 {strides = array<i32>} : memref<36x256xf32, #tpu.memory_space<vmem>>, vector<4x256xf32>,
    %c16_i32_4 = arith.constant 16 : i32
    %20 = tpu.dynamic_rotate %1 by %c16_i32_4 dim 1 : vector<4x256xf32>, i32 -> vector<4x256xf32>
    %cst_5 = arith.constant 0.000000e+00 : f32
    %21 = vector.shape_cast %6 : vector<1x256xi1> to vector<1x256xi1>
    %22 = vector.broadcast %21 : vector<1x256xi1> to vector<4x256xi1>
    %23 = vector.broadcast %cst_5 : f32 to vector<4x256xf32>
    %24 = arith.select %22, %20, %23 : vector<4x256xi1>, vector<4x256xf32>
    %c4 = arith.constant 4 : index
    %c0_6 = arith.constant 0 : index
    %25 = vector.load %arg5[%c4, %c0_6] : memref<36x256xf32, #tpu.memory_space<vmem>>, vector<4x256xf32>
    tpu.vector_store %arg5[%c4, %c0_6], %24 {strides = array<i32>} : memref<36x256xf32, #tpu.memory_space<vmem>>, vector<4x256xf32>,
    %c15_i32_7 = arith.constant 15 : i32
    %26 = tpu.dynamic_rotate %1 by %c15_i32_7 dim 1 : vector<4x256xf32>, i32 -> vector<4x256xf32>
    %27 = arith.andi %6, %12 : vector<1x256xi1>
    %cst_8 = arith.constant 0.000000e+00 : f32
    %28 = vector.shape_cast %27 : vector<1x256xi1> to vector<1x256xi1>
    %29 = vector.broadcast %28 : vector<1x256xi1> to vector<4x256xi1>
    %30 = vector.broadcast %cst_8 : f32 to vector<4x256xf32>
    %31 = arith.select %29, %26, %30 : vector<4x256xi1>, vector<4x256xf32>
    %c8 = arith.constant 8 : index
    %c0_9 = arith.constant 0 : index
    %32 = vector.load %arg5[%c8, %c0_9] : memref<36x256xf32, #tpu.memory_space<vmem>>, vector<4x256xf32>
    tpu.vector_store %arg5[%c8, %c0_9], %31 {strides = array<i32>} : memref<36x256xf32, #tpu.memory_space<vmem>>, vector<4x256xf32>,
    %c1_i32_10 = arith.constant 1 : i32
    %33 = tpu.dynamic_rotate %1 by %c1_i32_10 dim 1 : vector<4x256xf32>, i32 -> vector<4x256xf32>
    %cst_11 = arith.constant 0.000000e+00 : f32
    %34 = vector.shape_cast %10 : vector<1x256xi1> to vector<1x256xi1>
    %35 = vector.broadcast %34 : vector<1x256xi1> to vector<4x256xi1>
    %36 = vector.broadcast %cst_11 : f32 to vector<4x256xf32>
    %37 = arith.select %35, %33, %36 : vector<4x256xi1>, vector<4x256xf32>
    %c12 = arith.constant 12 : index
    %c0_12 = arith.constant 0 : index
    %38 = vector.load %arg5[%c12, %c0_12] : memref<36x256xf32, #tpu.memory_space<vmem>>, vector<4x256xf32>
    tpu.vector_store %arg5[%c12, %c0_12], %37 {strides = array<i32>} : memref<36x256xf32, #tpu.memory_space<vmem>>, vector<4x256xf32>,
    %c16 = arith.constant 16 : index
    %c0_13 = arith.constant 0 : index
    %39 = vector.load %arg5[%c16, %c0_13] : memref<36x256xf32, #tpu.memory_space<vmem>>, vector<4x256xf32>
    tpu.vector_store %arg5[%c16, %c0_13], %1 {strides = array<i32>} : memref<36x256xf32, #tpu.memory_space<vmem>>, vector<4x256xf32>,
    %c255_i32 = arith.constant 255 : i32
    %40 = tpu.dynamic_rotate %1 by %c255_i32 dim 1 : vector<4x256xf32>, i32 -> vector<4x256xf32>
    %cst_14 = arith.constant 0.000000e+00 : f32
    %41 = vector.shape_cast %12 : vector<1x256xi1> to vector<1x256xi1>
    %42 = vector.broadcast %41 : vector<1x256xi1> to vector<4x256xi1>
    %43 = vector.broadcast %cst_14 : f32 to vector<4x256xf32>
    %44 = arith.select %42, %40, %43 : vector<4x256xi1>, vector<4x256xf32>
    %c20 = arith.constant 20 : index
    %c0_15 = arith.constant 0 : index
    %45 = vector.load %arg5[%c20, %c0_15] : memref<36x256xf32, #tpu.memory_space<vmem>>, vector<4x256xf32>
    tpu.vector_store %arg5[%c20, %c0_15], %44 {strides = array<i32>} : memref<36x256xf32, #tpu.memory_space<vmem>>, vector<4x256xf32>,
    %c241_i32 = arith.constant 241 : i32
    %46 = tpu.dynamic_rotate %1 by %c241_i32 dim 1 : vector<4x256xf32>, i32 -> vector<4x256xf32>
    %47 = arith.andi %8, %10 : vector<1x256xi1>
    %cst_16 = arith.constant 0.000000e+00 : f32
    %48 = vector.shape_cast %47 : vector<1x256xi1> to vector<1x256xi1>
    %49 = vector.broadcast %48 : vector<1x256xi1> to vector<4x256xi1>
    %50 = vector.broadcast %cst_16 : f32 to vector<4x256xf32>
    %51 = arith.select %49, %46, %50 : vector<4x256xi1>, vector<4x256xf32>
    %c24 = arith.constant 24 : index
    %c0_17 = arith.constant 0 : index
    %52 = vector.load %arg5[%c24, %c0_17] : memref<36x256xf32, #tpu.memory_space<vmem>>, vector<4x256xf32>
    tpu.vector_store %arg5[%c24, %c0_17], %51 {strides = array<i32>} : memref<36x256xf32, #tpu.memory_space<vmem>>, vector<4x256xf32>,
    %c240_i32_18 = arith.constant 240 : i32
    %53 = tpu.dynamic_rotate %1 by %c240_i32_18 dim 1 : vector<4x256xf32>, i32 -> vector<4x256xf32>
    %cst_19 = arith.constant 0.000000e+00 : f32
    %54 = vector.shape_cast %8 : vector<1x256xi1> to vector<1x256xi1>
    %55 = vector.broadcast %54 : vector<1x256xi1> to vector<4x256xi1>
    %56 = vector.broadcast %cst_19 : f32 to vector<4x256xf32>
    %57 = arith.select %55, %53, %56 : vector<4x256xi1>, vector<4x256xf32>
    %c28 = arith.constant 28 : index
    %c0_20 = arith.constant 0 : index
    %58 = vector.load %arg5[%c28, %c0_20] : memref<36x256xf32, #tpu.memory_space<vmem>>, vector<4x256xf32>
    tpu.vector_store %arg5[%c28, %c0_20], %57 {strides = array<i32>} : memref<36x256xf32, #tpu.memory_space<vmem>>, vector<4x256xf32>,
    %c239_i32 = arith.constant 239 : i32
    %59 = tpu.dynamic_rotate %1 by %c239_i32 dim 1 : vector<4x256xf32>, i32 -> vector<4x256xf32>
    %60 = arith.andi %8, %12 : vector<1x256xi1>
    %cst_21 = arith.constant 0.000000e+00 : f32
    %61 = vector.shape_cast %60 : vector<1x256xi1> to vector<1x256xi1>
    %62 = vector.broadcast %61 : vector<1x256xi1> to vector<4x256xi1>
    %63 = vector.broadcast %cst_21 : f32 to vector<4x256xf32>
    %64 = arith.select %62, %59, %63 : vector<4x256xi1>, vector<4x256xf32>
    %c32 = arith.constant 32 : index
    %c0_22 = arith.constant 0 : index
    %65 = vector.load %arg5[%c32, %c0_22] : memref<36x256xf32, #tpu.memory_space<vmem>>, vector<4x256xf32>
    tpu.vector_store %arg5[%c32, %c0_22], %64 {strides = array<i32>} : memref<36x256xf32, #tpu.memory_space<vmem>>, vector<4x256xf32>,
    %c0_23 = arith.constant 0 : index
    %c0_24 = arith.constant 0 : index
    %66 = vector.load %arg1[%c0_23, %c0_24] : memref<4x36xf32, #tpu.memory_space<vmem>>, vector<4x36xf32>
    %c0_25 = arith.constant 0 : index
    %c0_26 = arith.constant 0 : index
    %67 = vector.load %arg5[%c0_25, %c0_26] : memref<36x256xf32, #tpu.memory_space<vmem>>, vector<36x256xf32>
    %cst_27 = arith.constant dense<0.000000e+00> : vector<4x256xf32>
    %68 = tpu.matmul %66, %67, %cst_27 {dimension_numbers = #tpu.dot_dimension_numbers<[1], [0], [0], [1], [0, 0, 1, 1], [], []>} : vector<4x36xf32>, vector<36x256xf32>, vector<4x256xf32> -> vector<4x256xf32>
    %cst_28 = arith.constant 0.000000e+00 : f32
    %69 = vector.broadcast %cst_28 : f32 to vector<4x256xf32>
    %70 = arith.maximumf %68, %69 : vector<4x256xf32>
    %c0_29 = arith.constant 0 : index
    %c0_30 = arith.constant 0 : index
    %71 = vector.load %arg2[%c0_29, %c0_30] : memref<4x4xf32, #tpu.memory_space<vmem>>, vector<4x4xf32>
    %cst_31 = arith.constant dense<0.000000e+00> : vector<4x256xf32>
    %72 = tpu.matmul %71, %70, %cst_31 {dimension_numbers = #tpu.dot_dimension_numbers<[1], [0], [0], [1], [0, 0, 1, 1], [], []>} : vector<4x4xf32>, vector<4x256xf32>, vector<4x256xf32> -> vector<4x256xf32>
    %73 = arith.addf %1, %72 : vector<4x256xf32>
    %c0_32 = arith.constant 0 : index
    %c0_33 = arith.constant 0 : index
    %c0_34 = arith.constant 0 : index
    %74 = vector.load %arg4[%c0_32, %c0_33, %c0_34] : memref<1x4x256xf32, #tpu.memory_space<vmem>>, vector<1x4x256xf32>
    %75 = vector.shape_cast %74 : vector<1x4x256xf32> to vector<4x256xf32>
    %76 = vector.shape_cast %73 : vector<4x256xf32> to vector<1x4x256xf32>
    tpu.vector_store %arg4[%c0_32, %c0_33, %c0_34], %76 {strides = array<i32>} : memref<1x4x256xf32, #tpu.memory_space<vmem>>, vector<1x4x256xf32>,
    return
  }
  func.func @transform_0(%arg0: i32) -> (i32, i32) {
    %c0_i32 = arith.constant 0 : i32
    %c0_i32_0 = arith.constant 0 : i32
    %c0_i32_1 = arith.constant 0 : i32
    return %c0_i32, %c0_i32_0 : i32, i32
  }
  func.func @transform_1(%arg0: i32) -> (i32, i32) {
    %c0_i32 = arith.constant 0 : i32
    %c0_i32_0 = arith.constant 0 : i32
    %c0_i32_1 = arith.constant 0 : i32
    return %c0_i32, %c0_i32_0 : i32, i32
  }
  func.func @transform_2(%arg0: i32) -> (i32, i32, i32) {
    %c0_i32 = arith.constant 0 : i32
    %c0_i32_0 = arith.constant 0 : i32
    %c0_i32_1 = arith.constant 0 : i32
    return %arg0, %c0_i32, %c0_i32_0 : i32, i32, i32
  }
  func.func @transform_3(%arg0: i32) -> (i32, i32, i32) {
    %c0_i32 = arith.constant 0 : i32
    %c0_i32_0 = arith.constant 0 : i32
    %c0_i32_1 = arith.constant 0 : i32
    return %arg0, %c0_i32, %c0_i32_0 : i32, i32, i32
  }
}

</mosaic_0001>

<llo_original>
// kernel: tpu_custom_call.1
$region0: #{tpu_custom_call.1}
  #allocation0 [shape = 'u32[]', space=smem, size = 0x4, offset = 0x4, fixed_abs, tag = 'smem constant byte address 0x4 - core index']
  #allocation1 [shape = 'u32[72,128]{1,0:T(1,128)}', space=vmem, size = 0x9000, scoped, tag = 'internal scratch']
  #allocation2 [shape = 'f32[36,256]{1,0:T(8,128)}', space=vmem, size = 0xa000, scoped, tag = 'scratch operand']
  %s0 = inlined_call_operand.hbm [shape: f32[4,36], index: 0, kind: input, shape index: {}]
  %s1 = inlined_call_operand.hbm [shape: f32[4,4], index: 1, kind: input, shape index: {}]
  %s2 = inlined_call_operand.hbm [shape: f32[2,4,256], index: 2, kind: input, shape index: {}]
  %s3 = inlined_call_operand.hbm [shape: f32[2,4,256], index: 3, kind: output, shape index: {}]
  %s4 = sld [smem:[#allocation0]]
  $region57: #{tpu_custom_call.1} parent=0
    _
  %s6 = ssub.s32 1, %s4
  %s7 = scalar_select 0, %s6, %s4
  $region1: #{tpu_custom_call.1} parent=0
    #allocation3 [shape = 'u8[2048]{0}', space=vmem, size = 0x800, scoped, tag = 'input window, operand 0, single buffered']
    #allocation4 [shape = 's32[2]{0}', space=sflag, size = 0x8, scoped, tag = 'scoped memory for tpu_custom_call.1']
    #allocation5 [shape = 's32[2]{0}', space=sflag, size = 0x8, scoped, tag = 'scoped memory for tpu_custom_call.1']
    #allocation6 [shape = 'u8[2048]{0}', space=vmem, size = 0x800, scoped, tag = 'input window, operand 1, single buffered']
    #allocation7 [shape = 's32[1]{0}', space=sflag, size = 0x4, scoped, tag = 'scoped memory for tpu_custom_call.1']
    #allocation8 [shape = 'u8[8192]{0}', space=vmem, size = 0x2000, scoped, tag = 'input window, operand 2']
    #allocation9 [shape = 'u8[8192]{0}', space=vmem, size = 0x2000, scoped, tag = 'output window, operand 0']
    %8 = vsyncpa [#allocation4], 0
    %9 = vsyncpa [#allocation7], 0
    %10 = vsyncpa [#allocation5], 0
    %s11 = scalar_lea.sflag [#allocation5], 1
    %12 = vsyncpa %s11, 0
    loop: start=0, step=1, limit=4
    $region2: #{tpu_custom_call.1} parent=1 // loop_pre_header
      _
    $region3: #{tpu_custom_call.1} parent=1 // loop_header
      %s14 = sphi 0, %s18
      %p15 = scmp.ge.s32.totalorder %s14, 4
      %s22 = sphi 0, %s22
      %s24 = sphi 0, %s22
      %s25 = sphi 0, %s24
      %s39 = sphi 0, %s25
      %s43 = sphi 0, %s43
      %s45 = sphi 0, %s43
      %s46 = sphi 0, %s45
      %s60 = sphi 0, %s46
      %s66 = sphi 0, %s68
      %s69 = sphi 0, %s66
      %s70 = sphi 0, %s69
      %s86 = sphi 0, %s70
      %s92 = sphi 0, %s94
      %s95 = sphi 0, %s92
      %s96 = sphi 0, %s95
      %s112 = sphi 0, %s96
    $region4: #{tpu_custom_call.1} parent=1 // loop_header_branch
      %17 = sbr.rel (%p15) target = $region8
    $region5: #{tpu_custom_call.1} parent=1 // loop_body
      %s19 = ssub.s32 %s14, 1
      %s20 = ssub.s32 %s14, 2
      %s21 = sadd.s32 %s14, 1
      %s23 = sadd.s32 %s22, 1
      %p26 = scmp.eq.s32.totalorder %s14, 1
      %p27 = scmp.ne.s32.totalorder %s22, %s24
      %p28 = scmp.eq.s32.totalorder %s14, 0
      %p29 = por %p27, %p28
      %p30 = scmp.ne.s32.totalorder %s22, %s24
      %p31 = scmp.eq.s32.totalorder %s19, 1
      %p32 = por %p30, %p31
      %p33 = scmp.ne.s32.totalorder %s24, %s25
      %p34 = scmp.eq.s32.totalorder %s19, 0
      %p35 = por %p33, %p34
      %p36 = scmp.ne.s32.totalorder %s24, %s25
      %p37 = scmp.eq.s32.totalorder %s20, 1
      %p38 = por %p36, %p37
      %p40 = scmp.ne.s32.totalorder %s25, %s39
      %p41 = scmp.eq.s32.totalorder %s20, 0
      %p42 = por %p40, %p41
      %s44 = sadd.s32 %s43, 1
      %p47 = scmp.eq.s32.totalorder %s14, 1
      %p48 = scmp.ne.s32.totalorder %s43, %s45
      %p49 = scmp.eq.s32.totalorder %s14, 0
      %p50 = por %p48, %p49
      %p51 = scmp.ne.s32.totalorder %s43, %s45
      %p52 = scmp.eq.s32.totalorder %s19, 1
      %p53 = por %p51, %p52
      %p54 = scmp.ne.s32.totalorder %s45, %s46
      %p55 = scmp.eq.s32.totalorder %s19, 0
      %p56 = por %p54, %p55
      %p57 = scmp.ne.s32.totalorder %s45, %s46
      %p58 = scmp.eq.s32.totalorder %s20, 1
      %p59 = por %p57, %p58
      %p61 = scmp.ne.s32.totalorder %s46, %s60
      %p62 = scmp.eq.s32.totalorder %s20, 0
      %p63 = por %p61, %p62
      %s64 = ssub.s32 %s14, %s21
      %p65 = scmp.eq.s32.totalorder %s64, 0
      %s67 = sadd.s32 %s66, 1
      %s68 = scalar_select %p65, %s66, %s67
      %p71 = pneg %p65
      %p72 = scmp.eq.s32.totalorder %s14, 1
      %p73 = por %p71, %p72
      %p74 = scmp.ne.s32.totalorder %s66, %s69
      %p75 = scmp.eq.s32.totalorder %s14, 0
      %p76 = por %p74, %p75
      %p77 = scmp.ne.s32.totalorder %s66, %s69
      %p78 = scmp.eq.s32.totalorder %s19, 1
      %p79 = por %p77, %p78
      %p80 = scmp.ne.s32.totalorder %s69, %s70
      %p81 = scmp.eq.s32.totalorder %s19, 0
      %p82 = por %p80, %p81
      %p83 = scmp.ne.s32.totalorder %s69, %s70
      %p84 = scmp.eq.s32.totalorder %s20, 1
      %p85 = por %p83, %p84
      %p87 = scmp.ne.s32.totalorder %s70, %s86
      %p88 = scmp.eq.s32.totalorder %s20, 0
      %p89 = por %p87, %p88
      %s90 = ssub.s32 %s14, %s21
      %p91 = scmp.eq.s32.totalorder %s90, 0
      %s93 = sadd.s32 %s92, 1
      %s94 = scalar_select %p91, %s92, %s93
      %p97 = pneg %p91
      %p98 = scmp.eq.s32.totalorder %s14, 1
      %p99 = por %p97, %p98
      %p100 = scmp.ne.s32.totalorder %s92, %s95
      %p101 = scmp.eq.s32.totalorder %s14, 0
      %p102 = por %p100, %p101
      %p103 = scmp.ne.s32.totalorder %s92, %s95
      %p104 = scmp.eq.s32.totalorder %s19, 1
      %p105 = por %p103, %p104
      %p106 = scmp.ne.s32.totalorder %s95, %s96
      %p107 = scmp.eq.s32.totalorder %s19, 0
      %p108 = por %p106, %p107
      %p109 = scmp.ne.s32.totalorder %s95, %s96
      %p110 = scmp.eq.s32.totalorder %s20, 1
      %p111 = por %p109, %p110
      %p113 = scmp.ne.s32.totalorder %s96, %s112
      %p114 = scmp.eq.s32.totalorder %s20, 0
      %p115 = por %p113, %p114
      %p116 = scmp.le.s32.totalorder 1, %s14
      %p117 = scmp.lt.s32.totalorder %s14, 3
      %p118 = pnand %p116, %p117
      %p119 = pneg %p118
      // Predicated region
      $region9: #{tpu_custom_call.1} parent=5 // pred_check
        _
      $region10: #{tpu_custom_call.1} parent=5 // pred_check_branch
        %121 = sbr.rel (%p118) target = $region12
      $region11: #{tpu_custom_call.1} parent=5 // pred_region
        %s122 = ssub.s32 %s14, 1
        // Predicated region
        $region13: #{tpu_custom_call.1} parent=11 // pred_check
          %p123 = pneg %p35
        $region14: #{tpu_custom_call.1} parent=11 // pred_check_branch
          %125 = sbr.rel (%p123) target = $region16
        $region15: #{tpu_custom_call.1} parent=11 // pred_region
          %127 = vsyncadd [#allocation4], 0
          %s129 = sshll.u32 %s0, 4
          %s130 = int_to_ptr.hbm [resolvable:$true] %s129
          %s131 = sshll.u32 [#allocation3], 4
          %s132 = int_to_ptr.vmem [resolvable:$true] %s131
          %134 = dma.hbm_to_vmem [thread:$0]  %s130, 64, %s132, [#allocation4]
        $region16: #{tpu_custom_call.1} parent=11 // pred_fallthru
          _
        // Predicated region
        $region17: #{tpu_custom_call.1} parent=11 // pred_check
          %p135 = pneg %p56
        $region18: #{tpu_custom_call.1} parent=11 // pred_check_branch
          %137 = sbr.rel (%p135) target = $region20
        $region19: #{tpu_custom_call.1} parent=11 // pred_region
          %139 = vsyncadd [#allocation7], 0
          %s141 = sshll.u32 %s1, 4
          %s142 = int_to_ptr.hbm [resolvable:$true] %s141
          %s143 = sshll.u32 [#allocation6], 4
          %s144 = int_to_ptr.vmem [resolvable:$true] %s143
          %146 = dma.hbm_to_vmem [thread:$0]  %s142, 64, %s144, [#allocation7]
        $region20: #{tpu_custom_call.1} parent=11 // pred_fallthru
          _
      $region12: #{tpu_custom_call.1} parent=5 // pred_fallthru
        _
      %p147 = scmp.lt.s32.totalorder %s14, 2
      // Predicated region
      $region21: #{tpu_custom_call.1} parent=5 // pred_check
        %p148 = pneg %p147
      $region22: #{tpu_custom_call.1} parent=5 // pred_check_branch
        %150 = sbr.rel (%p148) target = $region24
      $region23: #{tpu_custom_call.1} parent=5 // pred_region
        // Predicated region
        $region25: #{tpu_custom_call.1} parent=23 // pred_check
          %p151 = pneg %p76
        $region26: #{tpu_custom_call.1} parent=23 // pred_check_branch
          %153 = sbr.rel (%p151) target = $region28
        $region27: #{tpu_custom_call.1} parent=23 // pred_region
          %s154 = sand.u32 %s14, 1
          %s155 = scalar_lea.sflag [#allocation4], %s154
          %s156 = sand.u32 %s66, 1
          %s157 = smul.addr %s156, 8
          %s158 = scalar_lea.vmem [#allocation8], %s157
          %160 = vsyncadd %s155, 0
          %s161 = smul.addr %s14, 2
          %s162 = smul.addr %s161, 4
          %s163 = scalar_lea.hbm %s2, %s162
          %s165 = sshll.u32 %s163, 4
          %s166 = int_to_ptr.hbm [resolvable:$true] %s165
          %s167 = sshll.u32 %s158, 4
          %s168 = int_to_ptr.vmem [resolvable:$true] %s167
          %170 = dma.hbm_to_vmem [thread:$0]  %s166, 128, %s168, %s155
        $region28: #{tpu_custom_call.1} parent=23 // pred_fallthru
          _
      $region24: #{tpu_custom_call.1} parent=5 // pred_fallthru
        _
      %p171 = scmp.le.s32.totalorder 1, %s14
      %p172 = scmp.lt.s32.totalorder %s14, 3
      %p173 = pnand %p171, %p172
      %p174 = pneg %p173
      // Predicated region
      $region29: #{tpu_custom_call.1} parent=5 // pred_check
        _
      $region30: #{tpu_custom_call.1} parent=5 // pred_check_branch
        %176 = sbr.rel (%p173) target = $region32
      $region31: #{tpu_custom_call.1} parent=5 // pred_region
        %s177 = ssub.s32 %s14, 1
        // Predicated region
        $region33: #{tpu_custom_call.1} parent=31 // pred_check
          %p178 = pneg %p35
        $region34: #{tpu_custom_call.1} parent=31 // pred_check_branch
          %180 = sbr.rel (%p178) target = $region36
        $region35: #{tpu_custom_call.1} parent=31 // pred_region
          %182 = dma.done [#allocation4], 64
        $region36: #{tpu_custom_call.1} parent=31 // pred_fallthru
          _
        // Predicated region
        $region37: #{tpu_custom_call.1} parent=31 // pred_check
          %p183 = pneg %p56
        $region38: #{tpu_custom_call.1} parent=31 // pred_check_branch
          %185 = sbr.rel (%p183) target = $region40
        $region39: #{tpu_custom_call.1} parent=31 // pred_region
          %187 = dma.done [#allocation7], 64
        $region40: #{tpu_custom_call.1} parent=31 // pred_fallthru
          _
        %s188 = sand.u32 %s19, 1
        %s189 = scalar_lea.sflag [#allocation4], %s188
        %s190 = sand.u32 %s69, 1
        %s191 = smul.addr %s190, 8
        %s192 = scalar_lea.vmem [#allocation8], %s191
        // Predicated region
        $region41: #{tpu_custom_call.1} parent=31 // pred_check
          %p193 = pneg %p82
        $region42: #{tpu_custom_call.1} parent=31 // pred_check_branch
          %195 = sbr.rel (%p193) target = $region44
        $region43: #{tpu_custom_call.1} parent=31 // pred_region
          %197 = dma.done %s189, 128
        $region44: #{tpu_custom_call.1} parent=31 // pred_fallthru
          _
        %p198 = pneg %p35
        %p199 = pneg %p32
        %p200 = pneg %p56
        %p201 = pneg %p53
        %s202 = sand.u32 %s19, 1
        %s203 = scalar_lea.sflag [#allocation4], %s202
        %s204 = sand.u32 %s69, 1
        %s205 = smul.addr %s204, 8
        %s206 = scalar_lea.vmem [#allocation8], %s205
        %p207 = pneg %p82
        %p208 = pneg %p79
        %p209 = pneg %p108
        %p210 = pneg %p105
        %s211 = sand.u32 %s95, 1
        %s212 = scalar_lea.sflag [#allocation5], %s211
        %s213 = sand.u32 %s95, 1
        %s214 = smul.addr %s213, 8
        %s215 = scalar_lea.vmem [#allocation9], %s214
        %v216 = vld [vmem:[%s192] sm:$0xff]
        %v217 = vlaneseq
        %v218 = vand.u32 %v217, 127
        %v219 = vadd.s32 %v218, 128
        %v220 = vand.u32 %v218, 15
        %v221 = vand.u32 %v219, 15
        %vm222 = vcmp.ge.s32.totalorder %v218, 16
        %vm223 = vcmp.ge.s32.totalorder %v219, 16
        %vm224 = vcmp.lt.s32.totalorder %v218, 240
        %vm225 = vcmp.lt.s32.totalorder %v219, 240
        %vm226 = vcmp.ge.s32.totalorder %v220, 1
        %vm227 = vcmp.ge.s32.totalorder %v221, 1
        %vm228 = vcmp.le.s32.totalorder %v220, 14
        %vm229 = vcmp.le.s32.totalorder %v221, 14
        %231 = vst [vmem:[#allocation1] ss:$2 sm:$0xff] %v216
        %v232 = vld.sshfl [vmem:[#allocation1] sm:$0xff pattern:$0x75316420]
        %v233 = vld.sshfl [vmem:[#allocation1 + $0x8] sm:$0xff pattern:$0x75316420]
        %236 = vrot.lane.b32.xlu0 %v232, 17
        %v237 = vpop.permute.xlu0 %236
        %238 = vrot.lane.b32.xlu0 %v233, 17
        %v239 = vpop.permute.xlu0 %238
        %vm240 = vcmp.lt.s32.totalorder %v218, 17
        %v241 = vsel %vm240, %v237, %v239
        %v242 = vsel %vm240, %v239, %v237
        %vm243 = vmand %vm222, %vm226
        %vm244 = vmand %vm223, %vm227
        %v245 = vsel %vm243, 1, 0
        %v246 = vsel %vm244, 1, 0
        %vm247 = vcmp.eq.s32.totalorder %v245, 1
        %vm248 = vcmp.eq.s32.totalorder %v246, 1
        %v249 = vsel %vm247, %v242, 0.0
        %v250 = vsel %vm248, %v241, 0.0
        %251 = vst [vmem:[#allocation2] sm:$0xf] %v249
        %252 = vst [vmem:[#allocation2 + $0x8] sm:$0xf] %v250
        %253 = vst [vmem:[#allocation1] ss:$2 sm:$0xff] %v216
        %v254 = vld.sshfl [vmem:[#allocation1] sm:$0xff pattern:$0x75316420]
        %v255 = vld.sshfl [vmem:[#allocation1 + $0x8] sm:$0xff pattern:$0x75316420]
        %258 = vrot.lane.b32.xlu0 %v254, 16
        %v259 = vpop.permute.xlu0 %258
        %260 = vrot.lane.b32.xlu0 %v255, 16
        %v261 = vpop.permute.xlu0 %260
        %vm262 = vcmp.lt.s32.totalorder %v218, 16
        %v263 = vsel %vm262, %v259, %v261
        %v264 = vsel %vm262, %v261, %v259
        %v265 = vsel %vm222, 1, 0
        %v266 = vsel %vm223, 1, 0
        %vm267 = vcmp.eq.s32.totalorder %v265, 1
        %vm268 = vcmp.eq.s32.totalorder %v266, 1
        %v269 = vsel %vm267, %v264, 0.0
        %v270 = vsel %vm268, %v263, 0.0
        %v273 = vrot.slane %v269, 4
        %v274 = vrot.slane %v270, 4
        %277 = vst [vmem:[#allocation2] sm:$0xf0] %v273
        %278 = vst [vmem:[#allocation2 + $0x8] sm:$0xf0] %v274
        %279 = vst [vmem:[#allocation1] ss:$2 sm:$0xff] %v216
        %v280 = vld.sshfl [vmem:[#allocation1] sm:$0xff pattern:$0x75316420]
        %v281 = vld.sshfl [vmem:[#allocation1 + $0x8] sm:$0xff pattern:$0x75316420]
        %284 = vrot.lane.b32.xlu0 %v280, 15
        %v285 = vpop.permute.xlu0 %284
        %286 = vrot.lane.b32.xlu0 %v281, 15
        %v287 = vpop.permute.xlu0 %286
        %vm288 = vcmp.lt.s32.totalorder %v218, 15
        %v289 = vsel %vm288, %v285, %v287
        %v290 = vsel %vm288, %v287, %v285
        %vm291 = vmand %vm222, %vm228
        %vm292 = vmand %vm223, %vm229
        %v293 = vsel %vm291, 1, 0
        %v294 = vsel %vm292, 1, 0
        %vm295 = vcmp.eq.s32.totalorder %v293, 1
        %vm296 = vcmp.eq.s32.totalorder %v294, 1
        %v297 = vsel %vm295, %v290, 0.0
        %v298 = vsel %vm296, %v289, 0.0
        %299 = vst [vmem:[#allocation2 + $0x10] sm:$0xf] %v297
        %300 = vst [vmem:[#allocation2 + $0x18] sm:$0xf] %v298
        %301 = vst [vmem:[#allocation1] ss:$2 sm:$0xff] %v216
        %v302 = vld.sshfl [vmem:[#allocation1] sm:$0xff pattern:$0x75316420]
        %v303 = vld.sshfl [vmem:[#allocation1 + $0x8] sm:$0xff pattern:$0x75316420]
        %306 = vrot.lane.b32.xlu0 %v302, 1
        %v307 = vpop.permute.xlu0 %306
        %308 = vrot.lane.b32.xlu0 %v303, 1
        %v309 = vpop.permute.xlu0 %308
        %vm310 = vcmp.lt.s32.totalorder %v218, 1
        %v311 = vsel %vm310, %v307, %v309
        %v312 = vsel %vm310, %v309, %v307
        %v313 = vsel %vm226, 1, 0
        %v314 = vsel %vm227, 1, 0
        %vm315 = vcmp.eq.s32.totalorder %v313, 1
        %vm316 = vcmp.eq.s32.totalorder %v314, 1
        %v317 = vsel %vm315, %v312, 0.0
        %v318 = vsel %vm316, %v311, 0.0
        %v321 = vrot.slane %v317, 4
        %v322 = vrot.slane %v318, 4
        %325 = vst [vmem:[#allocation2 + $0x10] sm:$0xf0] %v321
        %326 = vst [vmem:[#allocation2 + $0x18] sm:$0xf0] %v322
        %327 = vst [vmem:[#allocation1] ss:$2 sm:$0xff] %v216
        %v328 = vld.sshfl [vmem:[#allocation1] sm:$0xff pattern:$0x75316420]
        %v329 = vld.sshfl [vmem:[#allocation1 + $0x8] sm:$0xff pattern:$0x75316420]
        %332 = vst [vmem:[#allocation2 + $0x20] sm:$0xf] %v328
        %333 = vst [vmem:[#allocation2 + $0x28] sm:$0xf] %v329
        %334 = vst [vmem:[#allocation1] ss:$2 sm:$0xff] %v216
        %v335 = vld.sshfl [vmem:[#allocation1] sm:$0xff pattern:$0x75316420]
        %v336 = vld.sshfl [vmem:[#allocation1 + $0x8] sm:$0xff pattern:$0x75316420]
        %339 = vrot.lane.b32.xlu0 %v335, 127
        %v340 = vpop.permute.xlu0 %339
        %341 = vrot.lane.b32.xlu0 %v336, 127
        %v342 = vpop.permute.xlu0 %341
        %vm343 = vcmp.lt.s32.totalorder %v218, 127
        %v344 = vsel %vm343, %v340, %v342
        %v345 = vsel %vm343, %v342, %v340
        %v346 = vsel %vm228, 1, 0
        %v347 = vsel %vm229, 1, 0
        %vm348 = vcmp.eq.s32.totalorder %v346, 1
        %vm349 = vcmp.eq.s32.totalorder %v347, 1
        %v350 = vsel %vm348, %v344, 0.0
        %v351 = vsel %vm349, %v345, 0.0
        %v354 = vrot.slane %v350, 4
        %v355 = vrot.slane %v351, 4
        %358 = vst [vmem:[#allocation2 + $0x20] sm:$0xf0] %v354
        %359 = vst [vmem:[#allocation2 + $0x28] sm:$0xf0] %v355
        %360 = vst [vmem:[#allocation1] ss:$2 sm:$0xff] %v216
        %v361 = vld.sshfl [vmem:[#allocation1] sm:$0xff pattern:$0x75316420]
        %v362 = vld.sshfl [vmem:[#allocation1 + $0x8] sm:$0xff pattern:$0x75316420]
        %365 = vrot.lane.b32.xlu0 %v361, 113
        %v366 = vpop.permute.xlu0 %365
        %367 = vrot.lane.b32.xlu0 %v362, 113
        %v368 = vpop.permute.xlu0 %367
        %vm369 = vcmp.lt.s32.totalorder %v218, 113
        %v370 = vsel %vm369, %v366, %v368
        %v371 = vsel %vm369, %v368, %v366
        %vm372 = vmand %vm224, %vm226
        %vm373 = vmand %vm225, %vm227
        %v374 = vsel %vm372, 1, 0
        %v375 = vsel %vm373, 1, 0
        %vm376 = vcmp.eq.s32.totalorder %v374, 1
        %vm377 = vcmp.eq.s32.totalorder %v375, 1
        %v378 = vsel %vm376, %v370, 0.0
        %v379 = vsel %vm377, %v371, 0.0
        %380 = vst [vmem:[#allocation2 + $0x30] sm:$0xf] %v378
        %381 = vst [vmem:[#allocation2 + $0x38] sm:$0xf] %v379
        %382 = vst [vmem:[#allocation1] ss:$2 sm:$0xff] %v216
        %v383 = vld.sshfl [vmem:[#allocation1] sm:$0xff pattern:$0x75316420]
        %v384 = vld.sshfl [vmem:[#allocation1 + $0x8] sm:$0xff pattern:$0x75316420]
        %387 = vrot.lane.b32.xlu0 %v383, 112
        %v388 = vpop.permute.xlu0 %387
        %389 = vrot.lane.b32.xlu0 %v384, 112
        %v390 = vpop.permute.xlu0 %389
        %vm391 = vcmp.lt.s32.totalorder %v218, 112
        %v392 = vsel %vm391, %v388, %v390
        %v393 = vsel %vm391, %v390, %v388
        %v394 = vsel %vm224, 1, 0
        %v395 = vsel %vm225, 1, 0
        %vm396 = vcmp.eq.s32.totalorder %v394, 1
        %vm397 = vcmp.eq.s32.totalorder %v395, 1
        %v398 = vsel %vm396, %v392, 0.0
        %v399 = vsel %vm397, %v393, 0.0
        %v402 = vrot.slane %v398, 4
        %v403 = vrot.slane %v399, 4
        %406 = vst [vmem:[#allocation2 + $0x30] sm:$0xf0] %v402
        %407 = vst [vmem:[#allocation2 + $0x38] sm:$0xf0] %v403
        %408 = vst [vmem:[#allocation1] ss:$2 sm:$0xff] %v216
        %v409 = vld.sshfl [vmem:[#allocation1] sm:$0xff pattern:$0x75316420]
        %v410 = vld.sshfl [vmem:[#allocation1 + $0x8] sm:$0xff pattern:$0x75316420]
        %413 = vrot.lane.b32.xlu0 %v409, 111
        %v414 = vpop.permute.xlu0 %413
        %415 = vrot.lane.b32.xlu0 %v410, 111
        %v416 = vpop.permute.xlu0 %415
        %vm417 = vcmp.lt.s32.totalorder %v218, 111
        %v418 = vsel %vm417, %v414, %v416
        %v419 = vsel %vm417, %v416, %v414
        %vm420 = vmand %vm224, %vm228
        %vm421 = vmand %vm225, %vm229
        %v422 = vsel %vm420, 1, 0
        %v423 = vsel %vm421, 1, 0
        %vm424 = vcmp.eq.s32.totalorder %v422, 1
        %vm425 = vcmp.eq.s32.totalorder %v423, 1
        %v426 = vsel %vm424, %v418, 0.0
        %v427 = vsel %vm425, %v419, 0.0
        %428 = vst [vmem:[#allocation2 + $0x40] sm:$0xf] %v426
        %429 = vst [vmem:[#allocation2 + $0x48] sm:$0xf] %v427
        %v430 = vld [vmem:[#allocation3] sm:$0xf]
        %v431 = vld [vmem:[#allocation2] sm:$0xff]
        %v432 = vld [vmem:[#allocation2 + $0x8] sm:$0xff]
        %v433 = vld [vmem:[#allocation2 + $0x10] sm:$0xff]
        %v434 = vld [vmem:[#allocation2 + $0x18] sm:$0xff]
        %v435 = vld [vmem:[#allocation2 + $0x20] sm:$0xff]
        %v436 = vld [vmem:[#allocation2 + $0x28] sm:$0xff]
        %v437 = vld [vmem:[#allocation2 + $0x30] sm:$0xff]
        %v438 = vld [vmem:[#allocation2 + $0x38] sm:$0xff]
        %v439 = vld [vmem:[#allocation2 + $0x40] sm:$0xf]
        %v440 = vld [vmem:[#allocation2 + $0x48] sm:$0xf]
        %vm441 = vcmask 293888
        %v443 = vsel %vm441, %v430, 0
        %vm445 = vcmask 1043456
        %v447 = vsel %vm445, %v439, 0
        %v450 = vsel %vm445, %v440, 0
        %452 = vmatpush.msra.mxu0 0.0
        %453 = vmatpush.msra.mxu0 0.0
        %454 = vmatpush.msra.mxu0 0.0
        %455 = vmatpush.msra.mxu0 0.0
        %456 = vmatpush.msra.mxu0 0.0
        %457 = vmatpush.msra.mxu0 0.0
        %458 = vmatpush.msra.mxu0 0.0
        %459 = vmatpush.msra.mxu0 0.0
        %460 = vmatpush.msra.mxu0 0.0
        %461 = vmatpush.msra.mxu0 0.0
        %462 = vmatpush.msra.mxu0 0.0
        %463 = vmatpush.msra.mxu0 %v447
        %464 = vmatpush.msra.mxu0 %v437
        %465 = vmatpush.msra.mxu0 %v435
        %466 = vmatpush.msra.mxu0 %v433
        %467 = vmatpush.msra.mxu0 %v431
        %468 = vmatmul.f32.gmra.mxu0 %v443
        %v469 = vpop.f32.mrf.mxu0
        %v470 = vadd.f32 0.0, %v469
        %471 = vdwg.mxu0
        %472 = vmatpush.msra.mxu0 0.0
        %473 = vmatpush.msra.mxu0 0.0
        %474 = vmatpush.msra.mxu0 0.0
        %475 = vmatpush.msra.mxu0 0.0
        %476 = vmatpush.msra.mxu0 0.0
        %477 = vmatpush.msra.mxu0 0.0
        %478 = vmatpush.msra.mxu0 0.0
        %479 = vmatpush.msra.mxu0 0.0
        %480 = vmatpush.msra.mxu0 0.0
        %481 = vmatpush.msra.mxu0 0.0
        %482 = vmatpush.msra.mxu0 0.0
        %483 = vmatpush.msra.mxu0 %v450
        %484 = vmatpush.msra.mxu0 %v438
        %485 = vmatpush.msra.mxu0 %v436
        %486 = vmatpush.msra.mxu0 %v434
        %487 = vmatpush.msra.mxu0 %v432
        %488 = vmatmul.f32.gmra.mxu0 %v443
        %v489 = vpop.f32.mrf.mxu0
        %v490 = vadd.f32 0.0, %v489
        %491 = vdwg.mxu0
        %v492 = vmax.f32 %v470, 0.0
        %v493 = vmax.f32 %v490, 0.0
        %v494 = vld [vmem:[#allocation6] sm:$0xf]
        %vm495 = vcmask 31744
        %v497 = vsel %vm495, %v494, 0
        %v500 = vsel %vm445, %v492, 0
        %v503 = vsel %vm445, %v493, 0
        %505 = vmatpush.msra.mxu0 0.0
        %506 = vmatpush.msra.mxu0 0.0
        %507 = vmatpush.msra.mxu0 0.0
        %508 = vmatpush.msra.mxu0 0.0
        %509 = vmatpush.msra.mxu0 0.0
        %510 = vmatpush.msra.mxu0 0.0
        %511 = vmatpush.msra.mxu0 0.0
        %512 = vmatpush.msra.mxu0 0.0
        %513 = vmatpush.msra.mxu0 0.0
        %514 = vmatpush.msra.mxu0 0.0
        %515 = vmatpush.msra.mxu0 0.0
        %516 = vmatpush.msra.mxu0 0.0
        %517 = vmatpush.msra.mxu0 0.0
        %518 = vmatpush.msra.mxu0 0.0
        %519 = vmatpush.msra.mxu0 0.0
        %520 = vmatpush.msra.mxu0 %v500
        %521 = vmatmul.f32.gmra.mxu0 %v497
        %v522 = vpop.f32.mrf.mxu0
        %v523 = vadd.f32 0.0, %v522
        %524 = vdwg.mxu0
        %525 = vmatpush.msra.mxu0 0.0
        %526 = vmatpush.msra.mxu0 0.0
        %527 = vmatpush.msra.mxu0 0.0
        %528 = vmatpush.msra.mxu0 0.0
        %529 = vmatpush.msra.mxu0 0.0
        %530 = vmatpush.msra.mxu0 0.0
        %531 = vmatpush.msra.mxu0 0.0
        %532 = vmatpush.msra.mxu0 0.0
        %533 = vmatpush.msra.mxu0 0.0
        %534 = vmatpush.msra.mxu0 0.0
        %535 = vmatpush.msra.mxu0 0.0
        %536 = vmatpush.msra.mxu0 0.0
        %537 = vmatpush.msra.mxu0 0.0
        %538 = vmatpush.msra.mxu0 0.0
        %539 = vmatpush.msra.mxu0 0.0
        %540 = vmatpush.msra.mxu0 %v503
        %541 = vmatmul.f32.gmra.mxu0 %v497
        %v542 = vpop.f32.mrf.mxu0
        %v543 = vadd.f32 0.0, %v542
        %544 = vdwg.mxu0
        %v547 = vrot.slane %v543, 4
        %v548 = vsel %vm445, %v523, %v547
        %v550 = vadd.f32 %v216, %v548
        %551 = vst [vmem:[%s215] sm:$0xff] %v550
        %s552 = sand.u32 %s95, 1
        %s553 = scalar_lea.sflag [#allocation5], %s552
        %s554 = sand.u32 %s95, 1
        %s555 = smul.addr %s554, 8
        %s556 = scalar_lea.vmem [#allocation9], %s555
        // Predicated region
        $region45: #{tpu_custom_call.1} parent=31 // pred_check
          %p557 = pneg %p105
        $region46: #{tpu_custom_call.1} parent=31 // pred_check_branch
          %559 = sbr.rel (%p557) target = $region48
        $region47: #{tpu_custom_call.1} parent=31 // pred_region
          %561 = vsyncadd %s553, 0
          %s562 = smul.addr %s19, 2
          %s563 = smul.addr %s562, 4
          %s564 = scalar_lea.hbm %s3, %s563
          %s566 = sshll.u32 %s556, 4
          %s567 = int_to_ptr.vmem [resolvable:$true] %s566
          %s568 = sshll.u32 %s564, 4
          %s569 = int_to_ptr.hbm [resolvable:$true] %s568
          %571 = dma.vmem_to_hbm [thread:$0]  %s567, 128, %s569, %s553
        $region48: #{tpu_custom_call.1} parent=31 // pred_fallthru
          _
      $region32: #{tpu_custom_call.1} parent=5 // pred_fallthru
        _
      %p572 = scmp.le.s32.totalorder 2, %s14
      // Predicated region
      $region49: #{tpu_custom_call.1} parent=5 // pred_check
        %p573 = pneg %p572
      $region50: #{tpu_custom_call.1} parent=5 // pred_check_branch
        %575 = sbr.rel (%p573) target = $region52
      $region51: #{tpu_custom_call.1} parent=5 // pred_region
        %s576 = ssub.s32 %s14, 2
        // Predicated region
        $region53: #{tpu_custom_call.1} parent=51 // pred_check
          %p577 = pneg %p111
        $region54: #{tpu_custom_call.1} parent=51 // pred_check_branch
          %579 = sbr.rel (%p577) target = $region56
        $region55: #{tpu_custom_call.1} parent=51 // pred_region
          %s580 = sand.u32 %s96, 1
          %s581 = scalar_lea.sflag [#allocation5], %s580
          %s582 = sand.u32 %s96, 1
          %s583 = smul.addr %s582, 8
          %s584 = scalar_lea.vmem [#allocation9], %s583
          %586 = dma.done %s581, 128
        $region56: #{tpu_custom_call.1} parent=51 // pred_fallthru
          _
      $region52: #{tpu_custom_call.1} parent=5 // pred_fallthru
        _
    $region6: #{tpu_custom_call.1} parent=1 // loop_footer
      %s18 = sadd.s32 1, %s14
    $region7: #{tpu_custom_call.1} parent=1 // loop_footer_branch
      %13 = sbr.rel target = $region3
    $region8: #{tpu_custom_call.1} parent=1 // loop_exit
      _
    %587 = vsyncpa [#allocation4], 1
    %s588 = scalar_lea.sflag [#allocation4], 1
    %589 = vsyncpa %s588, 1
    %590 = vsyncpa [#allocation7], 1
    %591 = vsyncpa [#allocation5], 1
    %s592 = scalar_lea.sflag [#allocation5], 1
    %593 = vsyncpa %s592, 1

</llo_original>
